<compile_context>
chip_gen: v7x
topology: tpu7x:2x2x1
jax: 0.10.0
libtpu: 0.0.40
codegen_flags: <defaults>
</compile_context>

<pallas_src>
import functools

import jax
import jax.numpy as jnp
from jax import lax
from jax.experimental import pallas as pl
from jax.experimental.pallas import tpu as pltpu


def _round_up(x, m):
    return ((x + m - 1) // m) * m


def _cdiv(a, b):
    return (a + b - 1) // b


def _device_info():
    """(vmem_capacity_bytes, looks_like_dual_tensorcore) with safe fallbacks."""
    vmem = 64 << 20           # conservative (v7x-sized) fallback
    dual = False
    try:
        info = pltpu.get_tpu_info()
        vmem = int(getattr(info, "vmem_capacity_bytes", vmem))
    except Exception:
        pass
    try:
        kind = jax.devices()[0].device_kind.lower()
        dual = ("v7" in kind) or ("7x" in kind)
    except Exception:
        pass
    return vmem, dual


def _in_spec(block, index_map, n_buf):
    """BlockSpec with optional deeper pipelining (pl.Buffered) when requested."""
    if n_buf > 2:
        try:
            return pl.BlockSpec(block, index_map, pipeline_mode=pl.Buffered(n_buf))
        except Exception:     # older jax without pipeline_mode -> default 2 buffers
            pass
    return pl.BlockSpec(block, index_map)


def _coral_body(src_ref, tgt_ref, srcs_ref, tgts_ref, out_ref,
                g_acc, s_sum, t_sum, sr_sum, tr_sum, *,
                inv_s, inv_t, corr_s, corr_t, scale, split_rhs):
    k = pl.program_id(1)                       # row-tile (reduction) axis

    @pl.when(k == 0)
    def _init():
        g_acc[...] = jnp.zeros_like(g_acc)
        s_sum[...] = jnp.zeros_like(s_sum)
        t_sum[...] = jnp.zeros_like(t_sum)
        if split_rhs:
            sr_sum[...] = jnp.zeros_like(sr_sum)
            tr_sum[...] = jnp.zeros_like(tr_sum)

    # Tiles stay in their input dtype (bf16 fast path on the MXU); f32
    # accumulation via preferred_element_type.  No concatenation: two signed
    # dot_general accumulations into the same strip-sized scratch.
    s = src_ref[...]                           # (TN, D) lhs, full feature width
    t = tgt_ref[...]
    s_r = srcs_ref[...]                        # (TN, STRIP) rhs column strip
    t_r = tgts_ref[...]

    dims = (((0,), (0,)), ((), ()))            # contract over the row axis
    upd = lax.dot_general(s, s_r, dims, preferred_element_type=jnp.float32) * inv_s
    upd = upd - lax.dot_general(t, t_r, dims, preferred_element_type=jnp.float32) * inv_t
    g_acc[...] += upd

    # Per-set column sums (f32) for the rank-1 mean correction.
    s_sum[...] += jnp.sum(s, axis=0, keepdims=True, dtype=jnp.float32)
    t_sum[...] += jnp.sum(t, axis=0, keepdims=True, dtype=jnp.float32)
    if split_rhs:
        sr_sum[...] += jnp.sum(s_r, axis=0, keepdims=True, dtype=jnp.float32)
        tr_sum[...] += jnp.sum(t_r, axis=0, keepdims=True, dtype=jnp.float32)

    @pl.when(k == pl.num_programs(1) - 1)
    def _finalize():
        ss = s_sum[...]                        # (1, D)
        ts = t_sum[...]
        ssr = sr_sum[...] if split_rhs else ss  # (1, STRIP)
        tsr = tr_sum[...] if split_rhs else ts
        # Both rank-1 mean corrections in ONE K=2 MXU pass; corr scalars and
        # signs folded into the (2, STRIP) operand.
        lhs = jnp.concatenate([ss, ts], axis=0)                          # (2, D)
        rhs = jnp.concatenate([ssr * (-corr_s), tsr * corr_t], axis=0)   # (2, STRIP)
        corr = lax.dot_general(lhs, rhs, dims, preferred_element_type=jnp.float32)
        diff = g_acc[...] + corr               # strip of (xc - xct)
        partial = jnp.sum(diff * diff) * scale
        out_ref[...] = jnp.full(out_ref.shape, partial, dtype=out_ref.dtype)


def _coral_kernel_fused(src_ref, tgt_ref, out_ref, g_acc, s_sum, t_sum, **params):
    # Single strip: the rhs operand IS the lhs tile (no duplicate HBM stream).
    _coral_body(src_ref, tgt_ref, src_ref, tgt_ref, out_ref,
                g_acc, s_sum, t_sum, None, None, split_rhs=False, **params)


def _coral_kernel_strip(src_ref, srcs_ref, tgt_ref, tgts_ref, out_ref,
                        g_acc, s_sum, t_sum, sr_sum, tr_sum, **params):
    _coral_body(src_ref, tgt_ref, srcs_ref, tgts_ref, out_ref,
                g_acc, s_sum, t_sum, sr_sum, tr_sum, split_rhs=True, **params)


def coral_loss(source, target, *, max_rows_per_tile=None, strip_width=None):
    """CORAL loss between source (ns, d) and target (nt, d). Returns a scalar."""
    ns, d = source.shape
    nt, d2 = target.shape
    assert d == d2, "feature dims must match"

    dt = jnp.result_type(source.dtype, target.dtype)
    if not jnp.issubdtype(dt, jnp.floating):
        dt = jnp.float32
    source = source.astype(dt)
    target = target.astype(dt)
    itemsize = jnp.dtype(dt).itemsize
    sub = {4: 8, 2: 16, 1: 32}.get(itemsize, 8)      # sublane granularity per dtype

    vmem_cap, dual_core = _device_info()
    cap_limit = max(int(vmem_cap * 0.84), 32 << 20)  # ~107 MiB v5e/v6e, ~54 MiB v7x

    # ---- column-strip tiling of the (d, d) Gram accumulator ------------------
    d_pad = _round_up(d, 128)
    acc_budget = max(int(vmem_cap * 0.45), 8 << 20)
    if strip_width is not None:
        strip = min(_round_up(int(strip_width), 128), d_pad)
    else:
        strip = min(d_pad, max(128, (acc_budget // (4 * d_pad)) // 128 * 128))
    n_strips = _cdiv(d_pad, strip)
    if strip_width is None and n_strips == 1 and dual_core and d_pad >= 256:
        # v7x: give the grid a parallel axis so both TensorCores get work.
        n_strips = 2
    strip = _round_up(_cdiv(d_pad, n_strips), 128)   # balance strip widths
    n_strips = _cdiv(d_pad, strip)
    d_pad = n_strips * strip                         # zero columns contribute 0
    split_rhs = n_strips > 1

    # ---- row tiling from the remaining VMEM budget ---------------------------
    n_max = max(ns, nt)
    if max_rows_per_tile is None:
        max_rows_per_tile = 1024 if itemsize <= 2 else 512
    n_buf_plan = 3 if d_pad <= 512 else 2
    acc_bytes = d_pad * strip * 4
    fixed = 3 * acc_bytes + (4 << 20)                # accumulator + dot temps + misc
    per_row = 2 * n_buf_plan * d_pad * itemsize + 8 * d_pad
    if split_rhs:
        per_row += 2 * n_buf_plan * strip * itemsize
    avail = max(cap_limit - fixed, per_row * sub)
    tn_cap = max(sub, (avail // per_row) // sub * sub)
    tn = int(max(sub, min(max_rows_per_tile, tn_cap, _round_up(n_max, sub))))
    k_steps = _cdiv(n_max, tn)
    rows_pad = k_steps * tn
    n_buf = n_buf_plan if (d_pad <= 512 and k_steps >= 4) else 2

    # Zero-pad rows and features; padding contributes exactly 0 everywhere.
    src_p = jnp.pad(source, ((0, rows_pad - ns), (0, d_pad - d)))
    tgt_p = jnp.pad(target, ((0, rows_pad - nt), (0, d_pad - d)))

    # NOTE: ns == 1 or nt == 1 is a divide-by-zero in the reference as well;
    # this kernel then returns NaN/Inf rather than a finite loss.
    inv_s = (1.0 / (ns - 1)) if ns > 1 else float("inf")
    inv_t = (1.0 / (nt - 1)) if nt > 1 else float("inf")
    params = dict(inv_s=inv_s, inv_t=inv_t,
                  corr_s=inv_s / ns, corr_t=inv_t / nt,
                  scale=1.0 / (4.0 * d * d))         # original (unpadded) d

    if split_rhs:
        kernel = functools.partial(_coral_kernel_strip, **params)
        in_specs = [
            _in_spec((tn, d_pad), lambda j, k: (k, 0), n_buf),   # src lhs (full)
            _in_spec((tn, strip), lambda j, k: (k, j), n_buf),   # src rhs strip
            _in_spec((tn, d_pad), lambda j, k: (k, 0), n_buf),   # tgt lhs (full)
            _in_spec((tn, strip), lambda j, k: (k, j), n_buf),   # tgt rhs strip
        ]
        args = (src_p, src_p, tgt_p, tgt_p)
        scratch = [
            pltpu.VMEM((d_pad, strip), jnp.float32),   # signed Gram accumulator
            pltpu.VMEM((1, d_pad), jnp.float32),       # src column sums (rows)
            pltpu.VMEM((1, d_pad), jnp.float32),       # tgt column sums (rows)
            pltpu.VMEM((1, strip), jnp.float32),       # src strip column sums
            pltpu.VMEM((1, strip), jnp.float32),       # tgt strip column sums
        ]
    else:
        kernel = functools.partial(_coral_kernel_fused, **params)
        in_specs = [
            _in_spec((tn, d_pad), lambda j, k: (k, 0), n_buf),
            _in_spec((tn, d_pad), lambda j, k: (k, 0), n_buf),
        ]
        args = (src_p, tgt_p)
        scratch = [
            pltpu.VMEM((d_pad, strip), jnp.float32),
            pltpu.VMEM((1, d_pad), jnp.float32),
            pltpu.VMEM((1, d_pad), jnp.float32),
        ]

    # VMEM residency estimate -> per-generation limit (leave pipeline headroom).
    buf_bytes = 2 * n_buf * tn * d_pad * itemsize
    if split_rhs:
        buf_bytes += 2 * n_buf * tn * strip * itemsize
    temp_bytes = 2 * acc_bytes + 4 * tn * d_pad * 4
    vmem_est = acc_bytes + buf_bytes + temp_bytes + (2 << 20)
    vmem_limit = int(min(max(vmem_est + (8 << 20), 32 << 20), cap_limit))

    out = pl.pallas_call(
        kernel,
        out_shape=jax.ShapeDtypeStruct((n_strips, 8, 128), jnp.float32),
        grid_spec=pltpu.PrefetchScalarGridSpec(
            num_scalar_prefetch=0,
            grid=(n_strips, k_steps),          # strips parallel, rows reduce
            in_specs=in_specs,
            out_specs=pl.BlockSpec((1, 8, 128), lambda j, k: (j, 0, 0)),
            scratch_shapes=scratch,
        ),
        compiler_params=pltpu.CompilerParams(
            dimension_semantics=("parallel", "arbitrary"),
            vmem_limit_bytes=vmem_limit,
        ),
    )(*args)
    return jnp.sum(out[:, 0, 0])


def coral_loss_ref(source, target):
    """Pure-JAX reference mirroring the PyTorch forward."""
    ns, d = source.shape
    nt = target.shape[0]
    source = source.astype(jnp.float32)
    target = target.astype(jnp.float32)
    xm = jnp.mean(source, axis=0, keepdims=True) - source
    xc = xm.T @ xm / (ns - 1)
    xmt = jnp.mean(target, axis=0, keepdims=True) - target
    xct = xmt.T @ xmt / (nt - 1)
    diff = xc - xct
    return jnp.sum(diff * diff) / (4.0 * d * d)


if __name__ == "__main__":
    key = jax.random.PRNGKey(0)
    k1, k2, k3, k4 = jax.random.split(key, 4)

    # Primary check: small 2-D inputs matching the module's convention.
    ns, nt, d = 8, 16, 32
    source = jax.random.normal(k1, (ns, d), dtype=jnp.float32)
    target = 0.5 * jax.random.normal(k2, (nt, d), dtype=jnp.float32) + 0.1
    loss = coral_loss(source, target)
    jax.block_until_ready(loss)
    ref = coral_loss_ref(source, target)
    assert jnp.allclose(loss, ref, rtol=1e-4, atol=1e-6), (loss, ref)

    # Secondary check: multi-strip accumulator + multi-step row reduction.
    ns2, nt2, d2 = 300, 260, 200
    src2 = jax.random.normal(k3, (ns2, d2), dtype=jnp.float32)
    tgt2 = 0.7 * jax.random.normal(k4, (nt2, d2), dtype=jnp.float32) - 0.05
    loss2 = coral_loss(src2, tgt2, max_rows_per_tile=128, strip_width=128)
    jax.block_until_ready(loss2)
    ref2 = coral_loss_ref(src2, tgt2)
    assert jnp.allclose(loss2, ref2, rtol=1e-3, atol=1e-6), (loss2, ref2)

    # Third check: bf16 fast path (16-row sublane granularity, f32 accumulate).
    src3 = src2[:64].astype(jnp.bfloat16)
    tgt3 = tgt2[:48].astype(jnp.bfloat16)
    loss3 = coral_loss(src3, tgt3)
    jax.block_until_ready(loss3)
    ref3 = coral_loss_ref(src3, tgt3)
    assert jnp.allclose(loss3, ref3, rtol=2e-2, atol=1e-5), (loss3, ref3)

    print("KERNEL_OK")
</pallas_src>

<mosaic_0001>
module attributes {stable_mosaic.version = 11 : i64} {
  func.func @_coral_kernel_fused(%arg0: i32, %arg1: i32, %arg2: memref<16x128xf32, #tpu.memory_space<vmem>>, %arg3: memref<16x128xf32, #tpu.memory_space<vmem>>, %arg4: memref<1x8x128xf32, #tpu.memory_space<vmem>>, %arg5: memref<128x128xf32, #tpu.memory_space<vmem>>, %arg6: memref<1x128xf32, #tpu.memory_space<vmem>>, %arg7: memref<1x128xf32, #tpu.memory_space<vmem>>) attributes {dimension_semantics = [#tpu.dimension_semantics<parallel>, #tpu.dimension_semantics<arbitrary>], iteration_bounds = array<i64: 1, 1>, scalar_prefetch = 0 : i64, scratch_operands = 3 : i64, tpu.core_type = #tpu.core_type<tc>, window_params = [{transform_indices = @transform_0, window_bounds = array<i64: 16, 128>}, {transform_indices = @transform_1, window_bounds = array<i64: 16, 128>}, {transform_indices = @transform_2, window_bounds = array<i64: 1, 8, 128>}]} {
    %c0_i32 = arith.constant 0 : i32
    %0 = arith.cmpi eq, %arg1, %c0_i32 : i32
    %1 = arith.extui %0 : i1 to i32
    %c0_i32_0 = arith.constant 0 : i32
    %2 = arith.cmpi ne, %1, %c0_i32_0 : i32
    scf.if %2 {
      %cst_27 = arith.constant 0.000000e+00 : f32
      %30 = vector.broadcast %cst_27 : f32 to vector<128x128xf32>
      %c0_28 = arith.constant 0 : index
      %c0_29 = arith.constant 0 : index
      %31 = vector.load %arg5[%c0_28, %c0_29] : memref<128x128xf32, #tpu.memory_space<vmem>>, vector<128x128xf32>
      tpu.vector_store %arg5[%c0_28, %c0_29], %30 {strides = array<i32>} : memref<128x128xf32, #tpu.memory_space<vmem>>, vector<128x128xf32>,
      %cst_30 = arith.constant 0.000000e+00 : f32
      %32 = vector.broadcast %cst_30 : f32 to vector<1x128xf32>
      %c0_31 = arith.constant 0 : index
      %c0_32 = arith.constant 0 : index
      %33 = vector.load %arg6[%c0_31, %c0_32] : memref<1x128xf32, #tpu.memory_space<vmem>>, vector<1x128xf32>
      tpu.vector_store %arg6[%c0_31, %c0_32], %32 {strides = array<i32>} : memref<1x128xf32, #tpu.memory_space<vmem>>, vector<1x128xf32>,
      %cst_33 = arith.constant 0.000000e+00 : f32
      %34 = vector.broadcast %cst_33 : f32 to vector<1x128xf32>
      %c0_34 = arith.constant 0 : index
      %c0_35 = arith.constant 0 : index
      %35 = vector.load %arg7[%c0_34, %c0_35] : memref<1x128xf32, #tpu.memory_space<vmem>>, vector<1x128xf32>
      tpu.vector_store %arg7[%c0_34, %c0_35], %34 {strides = array<i32>} : memref<1x128xf32, #tpu.memory_space<vmem>>, vector<1x128xf32>,
    } else {
    }
    %c0 = arith.constant 0 : index
    %c0_1 = arith.constant 0 : index
    %3 = vector.load %arg2[%c0, %c0_1] : memref<16x128xf32, #tpu.memory_space<vmem>>, vector<16x128xf32>
    %c0_2 = arith.constant 0 : index
    %c0_3 = arith.constant 0 : index
    %4 = vector.load %arg3[%c0_2, %c0_3] : memref<16x128xf32, #tpu.memory_space<vmem>>, vector<16x128xf32>
    %c0_4 = arith.constant 0 : index
    %c0_5 = arith.constant 0 : index
    %5 = vector.load %arg2[%c0_4, %c0_5] : memref<16x128xf32, #tpu.memory_space<vmem>>, vector<16x128xf32>
    %c0_6 = arith.constant 0 : index
    %c0_7 = arith.constant 0 : index
    %6 = vector.load %arg3[%c0_6, %c0_7] : memref<16x128xf32, #tpu.memory_space<vmem>>, vector<16x128xf32>
    %cst = arith.constant dense<0.000000e+00> : vector<128x128xf32>
    %7 = tpu.matmul %3, %5, %cst {dimension_numbers = #tpu.dot_dimension_numbers<[0], [0], [1], [1], [0, 1, 1, 1], [], []>} : vector<16x128xf32>, vector<16x128xf32>, vector<128x128xf32> -> vector<128x128xf32>
    %cst_8 = arith.constant 0.142857149 : f32
    %8 = vector.broadcast %cst_8 : f32 to vector<128x128xf32>
    %9 = arith.mulf %7, %8 : vector<128x128xf32>
    %cst_9 = arith.constant dense<0.000000e+00> : vector<128x128xf32>
    %10 = tpu.matmul %4, %6, %cst_9 {dimension_numbers = #tpu.dot_dimension_numbers<[0], [0], [1], [1], [0, 1, 1, 1], [], []>} : vector<16x128xf32>, vector<16x128xf32>, vector<128x128xf32> -> vector<128x128xf32>
    %cst_10 = arith.constant 0.0666666701 : f32
    %11 = vector.broadcast %cst_10 : f32 to vector<128x128xf32>
    %12 = arith.mulf %10, %11 : vector<128x128xf32>
    %13 = arith.subf %9, %12 : vector<128x128xf32>
    %c0_11 = arith.constant 0 : index
    %c0_12 = arith.constant 0 : index
    %14 = vector.load %arg5[%c0_11, %c0_12] : memref<128x128xf32, #tpu.memory_space<vmem>>, vector<128x128xf32>
    %15 = arith.addf %14, %13 : vector<128x128xf32>
    %c0_13 = arith.constant 0 : index
    %c0_14 = arith.constant 0 : index
    %16 = vector.load %arg5[%c0_13, %c0_14] : memref<128x128xf32, #tpu.memory_space<vmem>>, vector<128x128xf32>
    tpu.vector_store %arg5[%c0_13, %c0_14], %15 {strides = array<i32>} : memref<128x128xf32, #tpu.memory_space<vmem>>, vector<128x128xf32>,
    %c0_15 = arith.constant 0 : index
    %c0_16 = arith.constant 0 : index
    %17 = vector.load %arg6[%c0_15, %c0_16] : memref<1x128xf32, #tpu.memory_space<vmem>>, vector<1x128xf32>
    %cst_17 = arith.constant dense<0.000000e+00> : vector<128xf32>
    %18 = vector.multi_reduction <add>, %3, %cst_17 [0] : vector<16x128xf32> to vector<128xf32>
    %19 = vector.shape_cast %18 : vector<128xf32> to vector<1x128xf32>
    %20 = arith.addf %17, %19 : vector<1x128xf32>
    %c0_18 = arith.constant 0 : index
    %c0_19 = arith.constant 0 : index
    %21 = vector.load %arg6[%c0_18, %c0_19] : memref<1x128xf32, #tpu.memory_space<vmem>>, vector<1x128xf32>
    tpu.vector_store %arg6[%c0_18, %c0_19], %20 {strides = array<i32>} : memref<1x128xf32, #tpu.memory_space<vmem>>, vector<1x128xf32>,
    %c0_20 = arith.constant 0 : index
    %c0_21 = arith.constant 0 : index
    %22 = vector.load %arg7[%c0_20, %c0_21] : memref<1x128xf32, #tpu.memory_space<vmem>>, vector<1x128xf32>
    %cst_22 = arith.constant dense<0.000000e+00> : vector<128xf32>
    %23 = vector.multi_reduction <add>, %4, %cst_22 [0] : vector<16x128xf32> to vector<128xf32>
    %24 = vector.shape_cast %23 : vector<128xf32> to vector<1x128xf32>
    %25 = arith.addf %22, %24 : vector<1x128xf32>
    %c0_23 = arith.constant 0 : index
    %c0_24 = arith.constant 0 : index
    %26 = vector.load %arg7[%c0_23, %c0_24] : memref<1x128xf32, #tpu.memory_space<vmem>>, vector<1x128xf32>
    tpu.vector_store %arg7[%c0_23, %c0_24], %25 {strides = array<i32>} : memref<1x128xf32, #tpu.memory_space<vmem>>, vector<1x128xf32>,
    %c0_i32_25 = arith.constant 0 : i32
    %27 = arith.cmpi eq, %arg1, %c0_i32_25 : i32
    %28 = arith.extui %27 : i1 to i32
    %c0_i32_26 = arith.constant 0 : i32
    %29 = arith.cmpi ne, %28, %c0_i32_26 : i32
    scf.if %29 {
      %c0_27 = arith.constant 0 : index
      %c0_28 = arith.constant 0 : index
      %30 = vector.load %arg6[%c0_27, %c0_28] : memref<1x128xf32, #tpu.memory_space<vmem>>, vector<1x128xf32>
      %c0_29 = arith.constant 0 : index
      %c0_30 = arith.constant 0 : index
      %31 = vector.load %arg7[%c0_29, %c0_30] : memref<1x128xf32, #tpu.memory_space<vmem>>, vector<1x128xf32>
      %32 = tpu.concatenate %30, %31 in 0 : vector<1x128xf32>, vector<1x128xf32> -> vector<2x128xf32>
      %cst_31 = arith.constant -0.0178571437 : f32
      %33 = vector.broadcast %cst_31 : f32 to vector<1x128xf32>
      %34 = arith.mulf %30, %33 : vector<1x128xf32>
      %cst_32 = arith.constant 0.00416666688 : f32
      %35 = vector.broadcast %cst_32 : f32 to vector<1x128xf32>
      %36 = arith.mulf %31, %35 : vector<1x128xf32>
      %37 = tpu.concatenate %34, %36 in 0 : vector<1x128xf32>, vector<1x128xf32> -> vector<2x128xf32>
      %cst_33 = arith.constant dense<0.000000e+00> : vector<128x128xf32>
      %38 = tpu.matmul %32, %37, %cst_33 {dimension_numbers = #tpu.dot_dimension_numbers<[0], [0], [1], [1], [0, 1, 1, 1], [], []>} : vector<2x128xf32>, vector<2x128xf32>, vector<128x128xf32> -> vector<128x128xf32>
      %c0_34 = arith.constant 0 : index
      %c0_35 = arith.constant 0 : index
      %39 = vector.load %arg5[%c0_34, %c0_35] : memref<128x128xf32, #tpu.memory_space<vmem>>, vector<128x128xf32>
      %40 = arith.addf %39, %38 : vector<128x128xf32>
      %41 = arith.mulf %40, %40 : vector<128x128xf32>
      %42 = vector.shape_cast %41 : vector<128x128xf32> to vector<1x128x128xf32>
      %cst_36 = arith.constant dense<0.000000e+00> : vector<1xf32>
      %43 = vector.multi_reduction <add>, %42, %cst_36 [1, 2] : vector<1x128x128xf32> to vector<1xf32>
      %44 = vector.shape_cast %43 : vector<1xf32> to vector<1x1x1xf32>
      %45 = vector.extract %44[0, 0, 0] : f32 from vector<1x1x1xf32>
      %cst_37 = arith.constant 2.44140625E-4 : f32
      %46 = arith.mulf %45, %cst_37 : f32
      %47 = vector.broadcast %46 : f32 to vector<1x8x128xf32>
      %c0_38 = arith.constant 0 : index
      %c0_39 = arith.constant 0 : index
      %c0_40 = arith.constant 0 : index
      %48 = vector.load %arg4[%c0_38, %c0_39, %c0_40] : memref<1x8x128xf32, #tpu.memory_space<vmem>>, vector<1x8x128xf32>
      tpu.vector_store %arg4[%c0_38, %c0_39, %c0_40], %47 {strides = array<i32>} : memref<1x8x128xf32, #tpu.memory_space<vmem>>, vector<1x8x128xf32>,
    } else {
    }
    return
  }
  func.func @transform_0(%arg0: i32, %arg1: i32) -> (i32, i32) {
    %c0_i32 = arith.constant 0 : i32
    %c0_i32_0 = arith.constant 0 : i32
    return %arg1, %c0_i32 : i32, i32
  }
  func.func @transform_1(%arg0: i32, %arg1: i32) -> (i32, i32) {
    %c0_i32 = arith.constant 0 : i32
    %c0_i32_0 = arith.constant 0 : i32
    return %arg1, %c0_i32 : i32, i32
  }
  func.func @transform_2(%arg0: i32, %arg1: i32) -> (i32, i32, i32) {
    %c0_i32 = arith.constant 0 : i32
    %c0_i32_0 = arith.constant 0 : i32
    %c0_i32_1 = arith.constant 0 : i32
    return %arg0, %c0_i32, %c0_i32_0 : i32, i32, i32
  }
}

</mosaic_0001>

<llo_original>
// kernel: tpu_custom_call.1
$region0: #{tpu_custom_call.1}
  #allocation0 [shape = 'u32[]', space=smem, size = 0x4, offset = 0x4, fixed_abs, tag = 'smem constant byte address 0x4 - core index']
  #allocation1 [shape = 'u32[144,128]{1,0:T(1,128)}', space=vmem, size = 0x12000, scoped, tag = 'internal scratch']
  #allocation2 [shape = 'f32[128,128]{1,0:T(8,128)}', space=vmem, size = 0x10000, scoped, tag = 'scratch operand']
  #allocation3 [shape = 'f32[1,128]{1,0:T(1,128)}', space=vmem, size = 0x200, scoped, tag = 'scratch operand']
  #allocation4 [shape = 'f32[1,128]{1,0:T(1,128)}', space=vmem, size = 0x200, scoped, tag = 'scratch operand']
  %s0 = inlined_call_operand.hbm [shape: f32[16,128], index: 0, kind: input, shape index: {}]
  %s1 = inlined_call_operand.hbm [shape: f32[16,128], index: 1, kind: input, shape index: {}]
  %s2 = inlined_call_operand.hbm [shape: f32[1,8,128], index: 2, kind: output, shape index: {}]
  %s3 = sld [smem:[#allocation0]]
  $region34: #{tpu_custom_call.1} parent=0
    _
  %s5 = ssub.s32 1, %s3
  %s6 = scalar_select 0, %s5, %s3
  $region1: #{tpu_custom_call.1} parent=0
    #allocation5 [shape = 'u8[8192]{0}', space=vmem, size = 0x2000, scoped, tag = 'input window, operand 0, single buffered']
    #allocation6 [shape = 's32[1]{0}', space=sflag, size = 0x4, scoped, tag = 'scoped memory for tpu_custom_call.1']
    #allocation7 [shape = 's32[1]{0}', space=sflag, size = 0x4, scoped, tag = 'scoped memory for tpu_custom_call.1']
    #allocation8 [shape = 'u8[8192]{0}', space=vmem, size = 0x2000, scoped, tag = 'input window, operand 1, single buffered']
    #allocation9 [shape = 's32[1]{0}', space=sflag, size = 0x4, scoped, tag = 'scoped memory for tpu_custom_call.1']
    #allocation10 [shape = 'u8[4096]{0}', space=vmem, size = 0x1000, scoped, tag = 'output window, operand 0, single buffered']
    %7 = vsyncpa [#allocation6], 0
    %8 = vsyncpa [#allocation9], 0
    %9 = vsyncpa [#allocation7], 0
    // Predicated region
    $region2: #{tpu_custom_call.1} parent=1 // pred_check
      _
    $region3: #{tpu_custom_call.1} parent=1 // pred_check_branch
      %11 = sbr.rel (0) target = $region5
    $region4: #{tpu_custom_call.1} parent=1 // pred_region
      %s13 = ssub.s32 256, 256
      %14 = vsyncadd [#allocation6], %s13
      %s15 = sshll.u32 [#allocation5], 4
      %s16 = int_to_ptr.vmem [resolvable:$true] %s15
      %21 = dma.hbm_to_vmem [thread:$0]  %s0, 256, %s16, [#allocation6], 128, 128, 8
    $region5: #{tpu_custom_call.1} parent=1 // pred_fallthru
      _
    // Predicated region
    $region6: #{tpu_custom_call.1} parent=1 // pred_check
      _
    $region7: #{tpu_custom_call.1} parent=1 // pred_check_branch
      %23 = sbr.rel (0) target = $region9
    $region8: #{tpu_custom_call.1} parent=1 // pred_region
      %s25 = ssub.s32 256, 256
      %26 = vsyncadd [#allocation9], %s25
      %s27 = sshll.u32 [#allocation8], 4
      %s28 = int_to_ptr.vmem [resolvable:$true] %s27
      %33 = dma.hbm_to_vmem [thread:$0]  %s1, 256, %s28, [#allocation9], 128, 128, 8
    $region9: #{tpu_custom_call.1} parent=1 // pred_fallthru
      _
    // Predicated region
    $region10: #{tpu_custom_call.1} parent=1 // pred_check
      _
    $region11: #{tpu_custom_call.1} parent=1 // pred_check_branch
      %35 = sbr.rel (0) target = $region13
    $region12: #{tpu_custom_call.1} parent=1 // pred_region
      %36 = dma.done [#allocation6], 256
    $region13: #{tpu_custom_call.1} parent=1 // pred_fallthru
      _
    // Predicated region
    $region14: #{tpu_custom_call.1} parent=1 // pred_check
      _
    $region15: #{tpu_custom_call.1} parent=1 // pred_check_branch
      %38 = sbr.rel (0) target = $region17
    $region16: #{tpu_custom_call.1} parent=1 // pred_region
      %39 = dma.done [#allocation9], 256
    $region17: #{tpu_custom_call.1} parent=1 // pred_fallthru
      _
    %p40 = scmp.eq.s32.totalorder 0, 0
    // Predicated region
    $region18: #{tpu_custom_call.1} parent=1 // pred_check
      %p41 = pneg %p40
    $region19: #{tpu_custom_call.1} parent=1 // pred_check_branch
      %43 = sbr.rel (%p41) target = $region21
    $region20: #{tpu_custom_call.1} parent=1 // pred_region
      %44 = vst [vmem:[#allocation2] sm:$0xff] 0.0
      %45 = vst [vmem:[#allocation2 + $0x8] sm:$0xff] 0.0
      %46 = vst [vmem:[#allocation2 + $0x10] sm:$0xff] 0.0
      %47 = vst [vmem:[#allocation2 + $0x18] sm:$0xff] 0.0
      %48 = vst [vmem:[#allocation2 + $0x20] sm:$0xff] 0.0
      %49 = vst [vmem:[#allocation2 + $0x28] sm:$0xff] 0.0
      %50 = vst [vmem:[#allocation2 + $0x30] sm:$0xff] 0.0
      %51 = vst [vmem:[#allocation2 + $0x38] sm:$0xff] 0.0
      %52 = vst [vmem:[#allocation2 + $0x40] sm:$0xff] 0.0
      %53 = vst [vmem:[#allocation2 + $0x48] sm:$0xff] 0.0
      %54 = vst [vmem:[#allocation2 + $0x50] sm:$0xff] 0.0
      %55 = vst [vmem:[#allocation2 + $0x58] sm:$0xff] 0.0
      %56 = vst [vmem:[#allocation2 + $0x60] sm:$0xff] 0.0
      %57 = vst [vmem:[#allocation2 + $0x68] sm:$0xff] 0.0
      %58 = vst [vmem:[#allocation2 + $0x70] sm:$0xff] 0.0
      %59 = vst [vmem:[#allocation2 + $0x78] sm:$0xff] 0.0
      %60 = vst [vmem:[#allocation3] sm:$0x1] 0.0
      %61 = vst [vmem:[#allocation4] sm:$0x1] 0.0
    $region21: #{tpu_custom_call.1} parent=1 // pred_fallthru
      _
    %v62 = vld [vmem:[#allocation5] sm:$0xff]
    %v63 = vld [vmem:[#allocation5 + $0x8] sm:$0xff]
    %v64 = vld [vmem:[#allocation8] sm:$0xff]
    %v65 = vld [vmem:[#allocation8 + $0x8] sm:$0xff]
    %66 = vxpose.xlu0.b32.start [1/16] %v62, 128
    %67 = vxpose.xlu0.b32.cont [2/16] %v63, 128
    %68 = vxpose.xlu0.b32.cont [3/16] 0.0, 128
    %69 = vxpose.xlu0.b32.cont [4/16] 0.0, 128
    %70 = vxpose.xlu0.b32.cont [5/16] 0.0, 128
    %71 = vxpose.xlu0.b32.cont [6/16] 0.0, 128
    %72 = vxpose.xlu0.b32.cont [7/16] 0.0, 128
    %73 = vxpose.xlu0.b32.cont [8/16] 0.0, 128
    %74 = vxpose.xlu0.b32.cont [9/16] 0.0, 128
    %75 = vxpose.xlu0.b32.cont [10/16] 0.0, 128
    %76 = vxpose.xlu0.b32.cont [11/16] 0.0, 128
    %77 = vxpose.xlu0.b32.cont [12/16] 0.0, 128
    %78 = vxpose.xlu0.b32.cont [13/16] 0.0, 128
    %79 = vxpose.xlu0.b32.cont [14/16] 0.0, 128
    %80 = vxpose.xlu0.b32.cont [15/16] 0.0, 128
    %81 = vxpose.xlu0.b32.end [16/16] 0.0, 128
    %v82 = vpop.trf.xlu0
    %v83 = vpop.trf.xlu0
    %v84 = vpop.trf.xlu0
    %v85 = vpop.trf.xlu0
    %v86 = vpop.trf.xlu0
    %v87 = vpop.trf.xlu0
    %v88 = vpop.trf.xlu0
    %v89 = vpop.trf.xlu0
    %v90 = vpop.trf.xlu0
    %v91 = vpop.trf.xlu0
    %v92 = vpop.trf.xlu0
    %v93 = vpop.trf.xlu0
    %v94 = vpop.trf.xlu0
    %v95 = vpop.trf.xlu0
    %v96 = vpop.trf.xlu0
    %v97 = vpop.trf.xlu0
    %vm98 = vcmask 130048
    %v100 = vsel %vm98, %v82, 0
    %v103 = vsel %vm98, %v83, 0
    %v106 = vsel %vm98, %v84, 0
    %v109 = vsel %vm98, %v85, 0
    %v112 = vsel %vm98, %v86, 0
    %v115 = vsel %vm98, %v87, 0
    %v118 = vsel %vm98, %v88, 0
    %v121 = vsel %vm98, %v89, 0
    %v124 = vsel %vm98, %v90, 0
    %v127 = vsel %vm98, %v91, 0
    %v130 = vsel %vm98, %v92, 0
    %v133 = vsel %vm98, %v93, 0
    %v136 = vsel %vm98, %v94, 0
    %v139 = vsel %vm98, %v95, 0
    %v142 = vsel %vm98, %v96, 0
    %v145 = vsel %vm98, %v97, 0
    %147 = vmatprep.subr.mxu0 0.0
    %148 = vmatpush1.msra.mxu0 %v62
    %149 = vmatprep.subr.mxu0 0.0
    %150 = vmatpush1.msra.mxu0 %v63
    %151 = vmatprep.subr.mxu0 0.0
    %152 = vmatpush1.msra.mxu0 0.0
    %153 = vmatprep.subr.mxu0 0.0
    %154 = vmatpush1.msra.mxu0 0.0
    %155 = vmatprep.subr.mxu0 0.0
    %156 = vmatpush1.msra.mxu0 0.0
    %157 = vmatprep.subr.mxu0 0.0
    %158 = vmatpush1.msra.mxu0 0.0
    %159 = vmatprep.subr.mxu0 0.0
    %160 = vmatpush1.msra.mxu0 0.0
    %161 = vmatprep.subr.mxu0 0.0
    %162 = vmatpush1.msra.mxu0 0.0
    %163 = vmatprep.subr.mxu0 0.0
    %164 = vmatpush1.msra.mxu0 0.0
    %165 = vmatprep.subr.mxu0 0.0
    %166 = vmatpush1.msra.mxu0 0.0
    %167 = vmatprep.subr.mxu0 0.0
    %168 = vmatpush1.msra.mxu0 0.0
    %169 = vmatprep.subr.mxu0 0.0
    %170 = vmatpush1.msra.mxu0 0.0
    %171 = vmatprep.subr.mxu0 0.0
    %172 = vmatpush1.msra.mxu0 0.0
    %173 = vmatprep.subr.mxu0 0.0
    %174 = vmatpush1.msra.mxu0 0.0
    %175 = vmatprep.subr.mxu0 0.0
    %176 = vmatpush1.msra.mxu0 0.0
    %177 = vmatprep.subr.mxu0 0.0
    %178 = vmatpush1.msra.mxu0 0.0
    %179 = vmatprep.subr.mxu0 0.0
    %180 = vmatpush1.msra.mxu0 0.0
    %181 = vmatprep.subr.mxu0 0.0
    %182 = vmatpush1.msra.mxu0 0.0
    %183 = vmatprep.subr.mxu0 0.0
    %184 = vmatpush1.msra.mxu0 0.0
    %185 = vmatprep.subr.mxu0 0.0
    %186 = vmatpush1.msra.mxu0 0.0
    %187 = vmatprep.subr.mxu0 0.0
    %188 = vmatpush1.msra.mxu0 0.0
    %189 = vmatprep.subr.mxu0 0.0
    %190 = vmatpush1.msra.mxu0 0.0
    %191 = vmatprep.subr.mxu0 0.0
    %192 = vmatpush1.msra.mxu0 0.0
    %193 = vmatprep.subr.mxu0 0.0
    %194 = vmatpush1.msra.mxu0 0.0
    %195 = vmatprep.subr.mxu0 0.0
    %196 = vmatpush1.msra.mxu0 0.0
    %197 = vmatprep.subr.mxu0 0.0
    %198 = vmatpush1.msra.mxu0 0.0
    %199 = vmatprep.subr.mxu0 0.0
    %200 = vmatpush1.msra.mxu0 0.0
    %201 = vmatprep.subr.mxu0 0.0
    %202 = vmatpush1.msra.mxu0 0.0
    %203 = vmatprep.subr.mxu0 0.0
    %204 = vmatpush1.msra.mxu0 0.0
    %205 = vmatprep.subr.mxu0 0.0
    %206 = vmatpush1.msra.mxu0 0.0
    %207 = vmatprep.subr.mxu0 0.0
    %208 = vmatpush1.msra.mxu0 0.0
    %209 = vmatprep.subr.mxu0 0.0
    %210 = vmatpush1.msra.mxu0 0.0
    %211 = vmatprep.mubr.f32.mxu0 0.0
    %212 = vmatmul.mubr.f32.gmra.mrb[0].mxu0 %v100
    %v213 = vpop.f32.mrb[0].mxu0
    %v214 = vadd.f32 0.0, %v213
    %v215 = vpop.f32.mrb[0].mxu0
    %216 = vmatprep.mubr.f32.mxu0 0.0
    %217 = vmatmul.mubr.f32.gmra.mrb[0].mxu0 %v103
    %v218 = vpop.f32.mrb[0].mxu0
    %v219 = vadd.f32 0.0, %v218
    %v220 = vpop.f32.mrb[0].mxu0
    %221 = vmatprep.mubr.f32.mxu0 0.0
    %222 = vmatmul.mubr.f32.gmra.mrb[0].mxu0 %v106
    %v223 = vpop.f32.mrb[0].mxu0
    %v224 = vadd.f32 0.0, %v223
    %v225 = vpop.f32.mrb[0].mxu0
    %226 = vmatprep.mubr.f32.mxu0 0.0
    %227 = vmatmul.mubr.f32.gmra.mrb[0].mxu0 %v109
    %v228 = vpop.f32.mrb[0].mxu0
    %v229 = vadd.f32 0.0, %v228
    %v230 = vpop.f32.mrb[0].mxu0
    %231 = vmatprep.mubr.f32.mxu0 0.0
    %232 = vmatmul.mubr.f32.gmra.mrb[0].mxu0 %v112
    %v233 = vpop.f32.mrb[0].mxu0
    %v234 = vadd.f32 0.0, %v233
    %v235 = vpop.f32.mrb[0].mxu0
    %236 = vmatprep.mubr.f32.mxu0 0.0
    %237 = vmatmul.mubr.f32.gmra.mrb[0].mxu0 %v115
    %v238 = vpop.f32.mrb[0].mxu0
    %v239 = vadd.f32 0.0, %v238
    %v240 = vpop.f32.mrb[0].mxu0
    %241 = vmatprep.mubr.f32.mxu0 0.0
    %242 = vmatmul.mubr.f32.gmra.mrb[0].mxu0 %v118
    %v243 = vpop.f32.mrb[0].mxu0
    %v244 = vadd.f32 0.0, %v243
    %v245 = vpop.f32.mrb[0].mxu0
    %246 = vmatprep.mubr.f32.mxu0 0.0
    %247 = vmatmul.mubr.f32.gmra.mrb[0].mxu0 %v121
    %v248 = vpop.f32.mrb[0].mxu0
    %v249 = vadd.f32 0.0, %v248
    %v250 = vpop.f32.mrb[0].mxu0
    %251 = vmatprep.mubr.f32.mxu0 0.0
    %252 = vmatmul.mubr.f32.gmra.mrb[0].mxu0 %v124
    %v253 = vpop.f32.mrb[0].mxu0
    %v254 = vadd.f32 0.0, %v253
    %v255 = vpop.f32.mrb[0].mxu0
    %256 = vmatprep.mubr.f32.mxu0 0.0
    %257 = vmatmul.mubr.f32.gmra.mrb[0].mxu0 %v127
    %v258 = vpop.f32.mrb[0].mxu0
    %v259 = vadd.f32 0.0, %v258
    %v260 = vpop.f32.mrb[0].mxu0
    %261 = vmatprep.mubr.f32.mxu0 0.0
    %262 = vmatmul.mubr.f32.gmra.mrb[0].mxu0 %v130
    %v263 = vpop.f32.mrb[0].mxu0
    %v264 = vadd.f32 0.0, %v263
    %v265 = vpop.f32.mrb[0].mxu0
    %266 = vmatprep.mubr.f32.mxu0 0.0
    %267 = vmatmul.mubr.f32.gmra.mrb[0].mxu0 %v133
    %v268 = vpop.f32.mrb[0].mxu0
    %v269 = vadd.f32 0.0, %v268
    %v270 = vpop.f32.mrb[0].mxu0
    %271 = vmatprep.mubr.f32.mxu0 0.0
    %272 = vmatmul.mubr.f32.gmra.mrb[0].mxu0 %v136
    %v273 = vpop.f32.mrb[0].mxu0
    %v274 = vadd.f32 0.0, %v273
    %v275 = vpop.f32.mrb[0].mxu0
    %276 = vmatprep.mubr.f32.mxu0 0.0
    %277 = vmatmul.mubr.f32.gmra.mrb[0].mxu0 %v139
    %v278 = vpop.f32.mrb[0].mxu0
    %v279 = vadd.f32 0.0, %v278
    %v280 = vpop.f32.mrb[0].mxu0
    %281 = vmatprep.mubr.f32.mxu0 0.0
    %282 = vmatmul.mubr.f32.gmra.mrb[0].mxu0 %v142
    %v283 = vpop.f32.mrb[0].mxu0
    %v284 = vadd.f32 0.0, %v283
    %v285 = vpop.f32.mrb[0].mxu0
    %286 = vmatprep.mubr.f32.mxu0 0.0
    %287 = vmatmul.mubr.f32.gmra.mrb[0].mxu0 %v145
    %v288 = vpop.f32.mrb[0].mxu0
    %v289 = vadd.f32 0.0, %v288
    %v290 = vpop.f32.mrb[0].mxu0
    %291 = vdwg.mxu0
    %v292 = vmul.f32 %v214, 0.14285715
    %v293 = vmul.f32 %v219, 0.14285715
    %v294 = vmul.f32 %v224, 0.14285715
    %v295 = vmul.f32 %v229, 0.14285715
    %v296 = vmul.f32 %v234, 0.14285715
    %v297 = vmul.f32 %v239, 0.14285715
    %v298 = vmul.f32 %v244, 0.14285715
    %v299 = vmul.f32 %v249, 0.14285715
    %v300 = vmul.f32 %v254, 0.14285715
    %v301 = vmul.f32 %v259, 0.14285715
    %v302 = vmul.f32 %v264, 0.14285715
    %v303 = vmul.f32 %v269, 0.14285715
    %v304 = vmul.f32 %v274, 0.14285715
    %v305 = vmul.f32 %v279, 0.14285715
    %v306 = vmul.f32 %v284, 0.14285715
    %v307 = vmul.f32 %v289, 0.14285715
    %308 = vxpose.xlu0.b32.start [1/16] %v64, 128
    %309 = vxpose.xlu0.b32.cont [2/16] %v65, 128
    %310 = vxpose.xlu0.b32.cont [3/16] 0.0, 128
    %311 = vxpose.xlu0.b32.cont [4/16] 0.0, 128
    %312 = vxpose.xlu0.b32.cont [5/16] 0.0, 128
    %313 = vxpose.xlu0.b32.cont [6/16] 0.0, 128
    %314 = vxpose.xlu0.b32.cont [7/16] 0.0, 128
    %315 = vxpose.xlu0.b32.cont [8/16] 0.0, 128
    %316 = vxpose.xlu0.b32.cont [9/16] 0.0, 128
    %317 = vxpose.xlu0.b32.cont [10/16] 0.0, 128
    %318 = vxpose.xlu0.b32.cont [11/16] 0.0, 128
    %319 = vxpose.xlu0.b32.cont [12/16] 0.0, 128
    %320 = vxpose.xlu0.b32.cont [13/16] 0.0, 128
    %321 = vxpose.xlu0.b32.cont [14/16] 0.0, 128
    %322 = vxpose.xlu0.b32.cont [15/16] 0.0, 128
    %323 = vxpose.xlu0.b32.end [16/16] 0.0, 128
    %v324 = vpop.trf.xlu0
    %v325 = vpop.trf.xlu0
    %v326 = vpop.trf.xlu0
    %v327 = vpop.trf.xlu0
    %v328 = vpop.trf.xlu0
    %v329 = vpop.trf.xlu0
    %v330 = vpop.trf.xlu0
    %v331 = vpop.trf.xlu0
    %v332 = vpop.trf.xlu0
    %v333 = vpop.trf.xlu0
    %v334 = vpop.trf.xlu0
    %v335 = vpop.trf.xlu0
    %v336 = vpop.trf.xlu0
    %v337 = vpop.trf.xlu0
    %v338 = vpop.trf.xlu0
    %v339 = vpop.trf.xlu0
    %v341 = vsel %vm98, %v324, 0
    %v344 = vsel %vm98, %v325, 0
    %v347 = vsel %vm98, %v326, 0
    %v350 = vsel %vm98, %v327, 0
    %v353 = vsel %vm98, %v328, 0
    %v356 = vsel %vm98, %v329, 0
    %v359 = vsel %vm98, %v330, 0
    %v362 = vsel %vm98, %v331, 0
    %v365 = vsel %vm98, %v332, 0
    %v368 = vsel %vm98, %v333, 0
    %v371 = vsel %vm98, %v334, 0
    %v374 = vsel %vm98, %v335, 0
    %v377 = vsel %vm98, %v336, 0
    %v380 = vsel %vm98, %v337, 0
    %v383 = vsel %vm98, %v338, 0
    %v386 = vsel %vm98, %v339, 0
    %388 = vmatprep.subr.mxu0 0.0
    %389 = vmatpush1.msra.mxu0 %v64
    %390 = vmatprep.subr.mxu0 0.0
    %391 = vmatpush1.msra.mxu0 %v65
    %392 = vmatprep.subr.mxu0 0.0
    %393 = vmatpush1.msra.mxu0 0.0
    %394 = vmatprep.subr.mxu0 0.0
    %395 = vmatpush1.msra.mxu0 0.0
    %396 = vmatprep.subr.mxu0 0.0
    %397 = vmatpush1.msra.mxu0 0.0
    %398 = vmatprep.subr.mxu0 0.0
    %399 = vmatpush1.msra.mxu0 0.0
    %400 = vmatprep.subr.mxu0 0.0
    %401 = vmatpush1.msra.mxu0 0.0
    %402 = vmatprep.subr.mxu0 0.0
    %403 = vmatpush1.msra.mxu0 0.0
    %404 = vmatprep.subr.mxu0 0.0
    %405 = vmatpush1.msra.mxu0 0.0
    %406 = vmatprep.subr.mxu0 0.0
    %407 = vmatpush1.msra.mxu0 0.0
    %408 = vmatprep.subr.mxu0 0.0
    %409 = vmatpush1.msra.mxu0 0.0
    %410 = vmatprep.subr.mxu0 0.0
    %411 = vmatpush1.msra.mxu0 0.0
    %412 = vmatprep.subr.mxu0 0.0
    %413 = vmatpush1.msra.mxu0 0.0
    %414 = vmatprep.subr.mxu0 0.0
    %415 = vmatpush1.msra.mxu0 0.0
    %416 = vmatprep.subr.mxu0 0.0
    %417 = vmatpush1.msra.mxu0 0.0
    %418 = vmatprep.subr.mxu0 0.0
    %419 = vmatpush1.msra.mxu0 0.0
    %420 = vmatprep.subr.mxu0 0.0
    %421 = vmatpush1.msra.mxu0 0.0
    %422 = vmatprep.subr.mxu0 0.0
    %423 = vmatpush1.msra.mxu0 0.0
    %424 = vmatprep.subr.mxu0 0.0
    %425 = vmatpush1.msra.mxu0 0.0
    %426 = vmatprep.subr.mxu0 0.0
    %427 = vmatpush1.msra.mxu0 0.0
    %428 = vmatprep.subr.mxu0 0.0
    %429 = vmatpush1.msra.mxu0 0.0
    %430 = vmatprep.subr.mxu0 0.0
    %431 = vmatpush1.msra.mxu0 0.0
    %432 = vmatprep.subr.mxu0 0.0
    %433 = vmatpush1.msra.mxu0 0.0
    %434 = vmatprep.subr.mxu0 0.0
    %435 = vmatpush1.msra.mxu0 0.0
    %436 = vmatprep.subr.mxu0 0.0
    %437 = vmatpush1.msra.mxu0 0.0
    %438 = vmatprep.subr.mxu0 0.0
    %439 = vmatpush1.msra.mxu0 0.0
    %440 = vmatprep.subr.mxu0 0.0
    %441 = vmatpush1.msra.mxu0 0.0
    %442 = vmatprep.subr.mxu0 0.0
    %443 = vmatpush1.msra.mxu0 0.0
    %444 = vmatprep.subr.mxu0 0.0
    %445 = vmatpush1.msra.mxu0 0.0
    %446 = vmatprep.subr.mxu0 0.0
    %447 = vmatpush1.msra.mxu0 0.0
    %448 = vmatprep.subr.mxu0 0.0
    %449 = vmatpush1.msra.mxu0 0.0
    %450 = vmatprep.subr.mxu0 0.0
    %451 = vmatpush1.msra.mxu0 0.0
    %452 = vmatprep.mubr.f32.mxu0 0.0
    %453 = vmatmul.mubr.f32.gmra.mrb[0].mxu0 %v341
    %v454 = vpop.f32.mrb[0].mxu0
    %v455 = vadd.f32 0.0, %v454
    %v456 = vpop.f32.mrb[0].mxu0
    %457 = vmatprep.mubr.f32.mxu0 0.0
    %458 = vmatmul.mubr.f32.gmra.mrb[0].mxu0 %v344
    %v459 = vpop.f32.mrb[0].mxu0
    %v460 = vadd.f32 0.0, %v459
    %v461 = vpop.f32.mrb[0].mxu0
    %462 = vmatprep.mubr.f32.mxu0 0.0
    %463 = vmatmul.mubr.f32.gmra.mrb[0].mxu0 %v347
    %v464 = vpop.f32.mrb[0].mxu0
    %v465 = vadd.f32 0.0, %v464
    %v466 = vpop.f32.mrb[0].mxu0
    %467 = vmatprep.mubr.f32.mxu0 0.0
    %468 = vmatmul.mubr.f32.gmra.mrb[0].mxu0 %v350
    %v469 = vpop.f32.mrb[0].mxu0
    %v470 = vadd.f32 0.0, %v469
    %v471 = vpop.f32.mrb[0].mxu0
    %472 = vmatprep.mubr.f32.mxu0 0.0
    %473 = vmatmul.mubr.f32.gmra.mrb[0].mxu0 %v353
    %v474 = vpop.f32.mrb[0].mxu0
    %v475 = vadd.f32 0.0, %v474
    %v476 = vpop.f32.mrb[0].mxu0
    %477 = vmatprep.mubr.f32.mxu0 0.0
    %478 = vmatmul.mubr.f32.gmra.mrb[0].mxu0 %v356
    %v479 = vpop.f32.mrb[0].mxu0
    %v480 = vadd.f32 0.0, %v479
    %v481 = vpop.f32.mrb[0].mxu0
    %482 = vmatprep.mubr.f32.mxu0 0.0
    %483 = vmatmul.mubr.f32.gmra.mrb[0].mxu0 %v359
    %v484 = vpop.f32.mrb[0].mxu0
    %v485 = vadd.f32 0.0, %v484
    %v486 = vpop.f32.mrb[0].mxu0
    %487 = vmatprep.mubr.f32.mxu0 0.0
    %488 = vmatmul.mubr.f32.gmra.mrb[0].mxu0 %v362
    %v489 = vpop.f32.mrb[0].mxu0
    %v490 = vadd.f32 0.0, %v489
    %v491 = vpop.f32.mrb[0].mxu0
    %492 = vmatprep.mubr.f32.mxu0 0.0
    %493 = vmatmul.mubr.f32.gmra.mrb[0].mxu0 %v365
    %v494 = vpop.f32.mrb[0].mxu0
    %v495 = vadd.f32 0.0, %v494
    %v496 = vpop.f32.mrb[0].mxu0
    %497 = vmatprep.mubr.f32.mxu0 0.0
    %498 = vmatmul.mubr.f32.gmra.mrb[0].mxu0 %v368
    %v499 = vpop.f32.mrb[0].mxu0
    %v500 = vadd.f32 0.0, %v499
    %v501 = vpop.f32.mrb[0].mxu0
    %502 = vmatprep.mubr.f32.mxu0 0.0
    %503 = vmatmul.mubr.f32.gmra.mrb[0].mxu0 %v371
    %v504 = vpop.f32.mrb[0].mxu0
    %v505 = vadd.f32 0.0, %v504
    %v506 = vpop.f32.mrb[0].mxu0
    %507 = vmatprep.mubr.f32.mxu0 0.0
    %508 = vmatmul.mubr.f32.gmra.mrb[0].mxu0 %v374
    %v509 = vpop.f32.mrb[0].mxu0
    %v510 = vadd.f32 0.0, %v509
    %v511 = vpop.f32.mrb[0].mxu0
    %512 = vmatprep.mubr.f32.mxu0 0.0
    %513 = vmatmul.mubr.f32.gmra.mrb[0].mxu0 %v377
    %v514 = vpop.f32.mrb[0].mxu0
    %v515 = vadd.f32 0.0, %v514
    %v516 = vpop.f32.mrb[0].mxu0
    %517 = vmatprep.mubr.f32.mxu0 0.0
    %518 = vmatmul.mubr.f32.gmra.mrb[0].mxu0 %v380
    %v519 = vpop.f32.mrb[0].mxu0
    %v520 = vadd.f32 0.0, %v519
    %v521 = vpop.f32.mrb[0].mxu0
    %522 = vmatprep.mubr.f32.mxu0 0.0
    %523 = vmatmul.mubr.f32.gmra.mrb[0].mxu0 %v383
    %v524 = vpop.f32.mrb[0].mxu0
    %v525 = vadd.f32 0.0, %v524
    %v526 = vpop.f32.mrb[0].mxu0
    %527 = vmatprep.mubr.f32.mxu0 0.0
    %528 = vmatmul.mubr.f32.gmra.mrb[0].mxu0 %v386
    %v529 = vpop.f32.mrb[0].mxu0
    %v530 = vadd.f32 0.0, %v529
    %v531 = vpop.f32.mrb[0].mxu0
    %532 = vdwg.mxu0
    %v533 = vmul.f32 %v455, 0.06666667
    %v534 = vmul.f32 %v460, 0.06666667
    %v535 = vmul.f32 %v465, 0.06666667
    %v536 = vmul.f32 %v470, 0.06666667
    %v537 = vmul.f32 %v475, 0.06666667
    %v538 = vmul.f32 %v480, 0.06666667
    %v539 = vmul.f32 %v485, 0.06666667
    %v540 = vmul.f32 %v490, 0.06666667
    %v541 = vmul.f32 %v495, 0.06666667
    %v542 = vmul.f32 %v500, 0.06666667
    %v543 = vmul.f32 %v505, 0.06666667
    %v544 = vmul.f32 %v510, 0.06666667
    %v545 = vmul.f32 %v515, 0.06666667
    %v546 = vmul.f32 %v520, 0.06666667
    %v547 = vmul.f32 %v525, 0.06666667
    %v548 = vmul.f32 %v530, 0.06666667
    %v549 = vsub.f32 %v292, %v533
    %v550 = vsub.f32 %v293, %v534
    %v551 = vsub.f32 %v294, %v535
    %v552 = vsub.f32 %v295, %v536
    %v553 = vsub.f32 %v296, %v537
    %v554 = vsub.f32 %v297, %v538
    %v555 = vsub.f32 %v298, %v539
    %v556 = vsub.f32 %v299, %v540
    %v557 = vsub.f32 %v300, %v541
    %v558 = vsub.f32 %v301, %v542
    %v559 = vsub.f32 %v302, %v543
    %v560 = vsub.f32 %v303, %v544
    %v561 = vsub.f32 %v304, %v545
    %v562 = vsub.f32 %v305, %v546
    %v563 = vsub.f32 %v306, %v547
    %v564 = vsub.f32 %v307, %v548
    %v565 = vld [vmem:[#allocation2] sm:$0xff]
    %v566 = vld [vmem:[#allocation2 + $0x8] sm:$0xff]
    %v567 = vld [vmem:[#allocation2 + $0x10] sm:$0xff]
    %v568 = vld [vmem:[#allocation2 + $0x18] sm:$0xff]
    %v569 = vld [vmem:[#allocation2 + $0x20] sm:$0xff]
    %v570 = vld [vmem:[#allocation2 + $0x28] sm:$0xff]
    %v571 = vld [vmem:[#allocation2 + $0x30] sm:$0xff]
    %v572 = vld [vmem:[#allocation2 + $0x38] sm:$0xff]
    %v573 = vld [vmem:[#allocation2 + $0x40] sm:$0xff]
    %v574 = vld [vmem:[#allocation2 + $0x48] sm:$0xff]
    %v575 = vld [vmem:[#allocation2 + $0x50] sm:$0xff]
    %v576 = vld [vmem:[#allocation2 + $0x58] sm:$0xff]
    %v577 = vld [vmem:[#allocation2 + $0x60] sm:$0xff]
    %v578 = vld [vmem:[#allocation2 + $0x68] sm:$0xff]
    %v579 = vld [vmem:[#allocation2 + $0x70] sm:$0xff]
    %v580 = vld [vmem:[#allocation2 + $0x78] sm:$0xff]
    %v581 = vadd.f32 %v565, %v549
    %v582 = vadd.f32 %v566, %v550
    %v583 = vadd.f32 %v567, %v551
    %v584 = vadd.f32 %v568, %v552
    %v585 = vadd.f32 %v569, %v553
    %v586 = vadd.f32 %v570, %v554
    %v587 = vadd.f32 %v571, %v555
    %v588 = vadd.f32 %v572, %v556
    %v589 = vadd.f32 %v573, %v557
    %v590 = vadd.f32 %v574, %v558
    %v591 = vadd.f32 %v575, %v559
    %v592 = vadd.f32 %v576, %v560
    %v593 = vadd.f32 %v577, %v561
    %v594 = vadd.f32 %v578, %v562
    %v595 = vadd.f32 %v579, %v563
    %v596 = vadd.f32 %v580, %v564
    %597 = vst [vmem:[#allocation2] sm:$0xff] %v581
    %598 = vst [vmem:[#allocation2 + $0x8] sm:$0xff] %v582
    %599 = vst [vmem:[#allocation2 + $0x10] sm:$0xff] %v583
    %600 = vst [vmem:[#allocation2 + $0x18] sm:$0xff] %v584
    %601 = vst [vmem:[#allocation2 + $0x20] sm:$0xff] %v585
    %602 = vst [vmem:[#allocation2 + $0x28] sm:$0xff] %v586
    %603 = vst [vmem:[#allocation2 + $0x30] sm:$0xff] %v587
    %604 = vst [vmem:[#allocation2 + $0x38] sm:$0xff] %v588
    %605 = vst [vmem:[#allocation2 + $0x40] sm:$0xff] %v589
    %606 = vst [vmem:[#allocation2 + $0x48] sm:$0xff] %v590
    %607 = vst [vmem:[#allocation2 + $0x50] sm:$0xff] %v591
    %608 = vst [vmem:[#allocation2 + $0x58] sm:$0xff] %v592
    %609 = vst [vmem:[#allocation2 + $0x60] sm:$0xff] %v593
    %610 = vst [vmem:[#allocation2 + $0x68] sm:$0xff] %v594
    %611 = vst [vmem:[#allocation2 + $0x70] sm:$0xff] %v595
    %612 = vst [vmem:[#allocation2 + $0x78] sm:$0xff] %v596
    %v613 = vld [vmem:[#allocation3] sm:$0x1]
    %v614 = vadd.f32 %v62, %v63
    %v615 = vrot.slane %v614, 4
    %v616 = vadd.f32 %v614, %v615
    %v617 = vrot.slane %v616, 2
    %v618 = vadd.f32 %v616, %v617
    %v619 = vrot.slane %v618, 1
    %v620 = vadd.f32 %v618, %v619
    %v621 = vadd.f32 %v613, %v620
    %622 = vst [vmem:[#allocation3] sm:$0x1] %v621
    %v623 = vld [vmem:[#allocation4] sm:$0x1]
    %v624 = vadd.f32 %v64, %v65
    %v625 = vrot.slane %v624, 4
    %v626 = vadd.f32 %v624, %v625
    %v627 = vrot.slane %v626, 2
    %v628 = vadd.f32 %v626, %v627
    %v629 = vrot.slane %v628, 1
    %v630 = vadd.f32 %v628, %v629
    %v631 = vadd.f32 %v623, %v630
    %632 = vst [vmem:[#allocation4] sm:$0x1] %v631
    // Predicated region
    $region22: #{tpu_custom_call.1} parent=1 // pred_check
      %p633 = pneg %p40
    $region23: #{tpu_custom_call.1} parent=1 // pred_check_branch
      %635 = sbr.rel (%p633) target = $region25
    $region24: #{tpu_custom_call.1} parent=1 // pred_region
      %v636 = vld [vmem:[#allocation3] sm:$0x1]
      %v637 = vld [vmem:[#allocation4] sm:$0x1]
      %v639 = vlaneseq
      %v640 = vshrl.u32 %v639, 7
      %v641 = vsub.s32 0, %v640
      %v642 = vrot.slane %v637, %v641
      %vm644 = vcmask 1040384
      %v645 = vsel %vm644, %v636, %v642
      %v646 = vmul.f32 %v636, -0.017857144
      %v647 = vmul.f32 %v637, 0.004166667
      %v649 = vlaneseq
      %v650 = vshrl.u32 %v649, 7
      %v651 = vsub.s32 0, %v650
      %v652 = vrot.slane %v647, %v651
      %v654 = vsel %vm644, %v646, %v652
      %655 = vxpose.xlu0.b32.start [1/16] %v645, 128
      %656 = vxpose.xlu0.b32.cont [2/16] 0.0, 128
      %657 = vxpose.xlu0.b32.cont [3/16] 0.0, 128
      %658 = vxpose.xlu0.b32.cont [4/16] 0.0, 128
      %659 = vxpose.xlu0.b32.cont [5/16] 0.0, 128
      %660 = vxpose.xlu0.b32.cont [6/16] 0.0, 128
      %661 = vxpose.xlu0.b32.cont [7/16] 0.0, 128
      %662 = vxpose.xlu0.b32.cont [8/16] 0.0, 128
      %663 = vxpose.xlu0.b32.cont [9/16] 0.0, 128
      %664 = vxpose.xlu0.b32.cont [10/16] 0.0, 128
      %665 = vxpose.xlu0.b32.cont [11/16] 0.0, 128
      %666 = vxpose.xlu0.b32.cont [12/16] 0.0, 128
      %667 = vxpose.xlu0.b32.cont [13/16] 0.0, 128
      %668 = vxpose.xlu0.b32.cont [14/16] 0.0, 128
      %669 = vxpose.xlu0.b32.cont [15/16] 0.0, 128
      %670 = vxpose.xlu0.b32.end [16/16] 0.0, 128
      %v671 = vpop.trf.xlu0
      %v672 = vpop.trf.xlu0
      %v673 = vpop.trf.xlu0
      %v674 = vpop.trf.xlu0
      %v675 = vpop.trf.xlu0
      %v676 = vpop.trf.xlu0
      %v677 = vpop.trf.xlu0
      %v678 = vpop.trf.xlu0
      %v679 = vpop.trf.xlu0
      %v680 = vpop.trf.xlu0
      %v681 = vpop.trf.xlu0
      %v682 = vpop.trf.xlu0
      %v683 = vpop.trf.xlu0
      %v684 = vpop.trf.xlu0
      %v685 = vpop.trf.xlu0
      %v686 = vpop.trf.xlu0
      %vm687 = vcmask 15360
      %v689 = vsel %vm687, %v671, 0
      %v692 = vsel %vm687, %v672, 0
      %v695 = vsel %vm687, %v673, 0
      %v698 = vsel %vm687, %v674, 0
      %v701 = vsel %vm687, %v675, 0
      %v704 = vsel %vm687, %v676, 0
      %v707 = vsel %vm687, %v677, 0
      %v710 = vsel %vm687, %v678, 0
      %v713 = vsel %vm687, %v679, 0
      %v716 = vsel %vm687, %v680, 0
      %v719 = vsel %vm687, %v681, 0
      %v722 = vsel %vm687, %v682, 0
      %v725 = vsel %vm687, %v683, 0
      %v728 = vsel %vm687, %v684, 0
      %v731 = vsel %vm687, %v685, 0
      %v734 = vsel %vm687, %v686, 0
      %vm736 = vcmask 1041408
      %v738 = vsel %vm736, %v654, 0
      %740 = vmatprep.subr.mxu0 0.0
      %741 = vmatpush1.msra.mxu0 %v738
      %742 = vmatprep.subr.mxu0 0.0
      %743 = vmatpush1.msra.mxu0 0.0
      %744 = vmatprep.subr.mxu0 0.0
      %745 = vmatpush1.msra.mxu0 0.0
      %746 = vmatprep.subr.mxu0 0.0
      %747 = vmatpush1.msra.mxu0 0.0
      %748 = vmatprep.subr.mxu0 0.0
      %749 = vmatpush1.msra.mxu0 0.0
      %750 = vmatprep.subr.mxu0 0.0
      %751 = vmatpush1.msra.mxu0 0.0
      %752 = vmatprep.subr.mxu0 0.0
      %753 = vmatpush1.msra.mxu0 0.0
      %754 = vmatprep.subr.mxu0 0.0
      %755 = vmatpush1.msra.mxu0 0.0
      %756 = vmatprep.subr.mxu0 0.0
      %757 = vmatpush1.msra.mxu0 0.0
      %758 = vmatprep.subr.mxu0 0.0
      %759 = vmatpush1.msra.mxu0 0.0
      %760 = vmatprep.subr.mxu0 0.0
      %761 = vmatpush1.msra.mxu0 0.0
      %762 = vmatprep.subr.mxu0 0.0
      %763 = vmatpush1.msra.mxu0 0.0
      %764 = vmatprep.subr.mxu0 0.0
      %765 = vmatpush1.msra.mxu0 0.0
      %766 = vmatprep.subr.mxu0 0.0
      %767 = vmatpush1.msra.mxu0 0.0
      %768 = vmatprep.subr.mxu0 0.0
      %769 = vmatpush1.msra.mxu0 0.0
      %770 = vmatprep.subr.mxu0 0.0
      %771 = vmatpush1.msra.mxu0 0.0
      %772 = vmatprep.subr.mxu0 0.0
      %773 = vmatpush1.msra.mxu0 0.0
      %774 = vmatprep.subr.mxu0 0.0
      %775 = vmatpush1.msra.mxu0 0.0
      %776 = vmatprep.subr.mxu0 0.0
      %777 = vmatpush1.msra.mxu0 0.0
      %778 = vmatprep.subr.mxu0 0.0
      %779 = vmatpush1.msra.mxu0 0.0
      %780 = vmatprep.subr.mxu0 0.0
      %781 = vmatpush1.msra.mxu0 0.0
      %782 = vmatprep.subr.mxu0 0.0
      %783 = vmatpush1.msra.mxu0 0.0
      %784 = vmatprep.subr.mxu0 0.0
      %785 = vmatpush1.msra.mxu0 0.0
      %786 = vmatprep.subr.mxu0 0.0
      %787 = vmatpush1.msra.mxu0 0.0
      %788 = vmatprep.subr.mxu0 0.0
      %789 = vmatpush1.msra.mxu0 0.0
      %790 = vmatprep.subr.mxu0 0.0
      %791 = vmatpush1.msra.mxu0 0.0
      %792 = vmatprep.subr.mxu0 0.0
      %793 = vmatpush1.msra.mxu0 0.0
      %794 = vmatprep.subr.mxu0 0.0
      %795 = vmatpush1.msra.mxu0 0.0
      %796 = vmatprep.subr.mxu0 0.0
      %797 = vmatpush1.msra.mxu0 0.0
      %798 = vmatprep.subr.mxu0 0.0
      %799 = vmatpush1.msra.mxu0 0.0
      %800 = vmatprep.subr.mxu0 0.0
      %801 = vmatpush1.msra.mxu0 0.0
      %802 = vmatprep.subr.mxu0 0.0
      %803 = vmatpush1.msra.mxu0 0.0
      %804 = vmatprep.mubr.f32.mxu0 0.0
      %805 = vmatmul.mubr.f32.gmra.mrb[0].mxu0 %v689
      %v806 = vpop.f32.mrb[0].mxu0
      %v807 = vadd.f32 0.0, %v806
      %v808 = vpop.f32.mrb[0].mxu0
      %809 = vmatprep.mubr.f32.mxu0 0.0
      %810 = vmatmul.mubr.f32.gmra.mrb[0].mxu0 %v692
      %v811 = vpop.f32.mrb[0].mxu0
      %v812 = vadd.f32 0.0, %v811
      %v813 = vpop.f32.mrb[0].mxu0
      %814 = vmatprep.mubr.f32.mxu0 0.0
      %815 = vmatmul.mubr.f32.gmra.mrb[0].mxu0 %v695
      %v816 = vpop.f32.mrb[0].mxu0
      %v817 = vadd.f32 0.0, %v816
      %v818 = vpop.f32.mrb[0].mxu0
      %819 = vmatprep.mubr.f32.mxu0 0.0
      %820 = vmatmul.mubr.f32.gmra.mrb[0].mxu0 %v698
      %v821 = vpop.f32.mrb[0].mxu0
      %v822 = vadd.f32 0.0, %v821
      %v823 = vpop.f32.mrb[0].mxu0
      %824 = vmatprep.mubr.f32.mxu0 0.0
      %825 = vmatmul.mubr.f32.gmra.mrb[0].mxu0 %v701
      %v826 = vpop.f32.mrb[0].mxu0
      %v827 = vadd.f32 0.0, %v826
      %v828 = vpop.f32.mrb[0].mxu0
      %829 = vmatprep.mubr.f32.mxu0 0.0
      %830 = vmatmul.mubr.f32.gmra.mrb[0].mxu0 %v704
      %v831 = vpop.f32.mrb[0].mxu0
      %v832 = vadd.f32 0.0, %v831
      %v833 = vpop.f32.mrb[0].mxu0
      %834 = vmatprep.mubr.f32.mxu0 0.0
      %835 = vmatmul.mubr.f32.gmra.mrb[0].mxu0 %v707
      %v836 = vpop.f32.mrb[0].mxu0
      %v837 = vadd.f32 0.0, %v836
      %v838 = vpop.f32.mrb[0].mxu0
      %839 = vmatprep.mubr.f32.mxu0 0.0
      %840 = vmatmul.mubr.f32.gmra.mrb[0].mxu0 %v710
      %v841 = vpop.f32.mrb[0].mxu0
      %v842 = vadd.f32 0.0, %v841
      %v843 = vpop.f32.mrb[0].mxu0
      %844 = vmatprep.mubr.f32.mxu0 0.0
      %845 = vmatmul.mubr.f32.gmra.mrb[0].mxu0 %v713
      %v846 = vpop.f32.mrb[0].mxu0
      %v847 = vadd.f32 0.0, %v846
      %v848 = vpop.f32.mrb[0].mxu0
      %849 = vmatprep.mubr.f32.mxu0 0.0
      %850 = vmatmul.mubr.f32.gmra.mrb[0].mxu0 %v716
      %v851 = vpop.f32.mrb[0].mxu0
      %v852 = vadd.f32 0.0, %v851
      %v853 = vpop.f32.mrb[0].mxu0
      %854 = vmatprep.mubr.f32.mxu0 0.0
      %855 = vmatmul.mubr.f32.gmra.mrb[0].mxu0 %v719
      %v856 = vpop.f32.mrb[0].mxu0
      %v857 = vadd.f32 0.0, %v856
      %v858 = vpop.f32.mrb[0].mxu0
      %859 = vmatprep.mubr.f32.mxu0 0.0
      %860 = vmatmul.mubr.f32.gmra.mrb[0].mxu0 %v722
      %v861 = vpop.f32.mrb[0].mxu0
      %v862 = vadd.f32 0.0, %v861
      %v863 = vpop.f32.mrb[0].mxu0
      %864 = vmatprep.mubr.f32.mxu0 0.0
      %865 = vmatmul.mubr.f32.gmra.mrb[0].mxu0 %v725
      %v866 = vpop.f32.mrb[0].mxu0
      %v867 = vadd.f32 0.0, %v866
      %v868 = vpop.f32.mrb[0].mxu0
      %869 = vmatprep.mubr.f32.mxu0 0.0
      %870 = vmatmul.mubr.f32.gmra.mrb[0].mxu0 %v728
      %v871 = vpop.f32.mrb[0].mxu0
      %v872 = vadd.f32 0.0, %v871
      %v873 = vpop.f32.mrb[0].mxu0
      %874 = vmatprep.mubr.f32.mxu0 0.0
      %875 = vmatmul.mubr.f32.gmra.mrb[0].mxu0 %v731
      %v876 = vpop.f32.mrb[0].mxu0
      %v877 = vadd.f32 0.0, %v876
      %v878 = vpop.f32.mrb[0].mxu0
      %879 = vmatprep.mubr.f32.mxu0 0.0
      %880 = vmatmul.mubr.f32.gmra.mrb[0].mxu0 %v734
      %v881 = vpop.f32.mrb[0].mxu0
      %v882 = vadd.f32 0.0, %v881
      %v883 = vpop.f32.mrb[0].mxu0
      %884 = vdwg.mxu0
      %v885 = vld [vmem:[#allocation2] sm:$0xff]
      %v886 = vld [vmem:[#allocation2 + $0x8] sm:$0xff]
      %v887 = vld [vmem:[#allocation2 + $0x10] sm:$0xff]
      %v888 = vld [vmem:[#allocation2 + $0x18] sm:$0xff]
      %v889 = vld [vmem:[#allocation2 + $0x20] sm:$0xff]
      %v890 = vld [vmem:[#allocation2 + $0x28] sm:$0xff]
      %v891 = vld [vmem:[#allocation2 + $0x30] sm:$0xff]
      %v892 = vld [vmem:[#allocation2 + $0x38] sm:$0xff]
      %v893 = vld [vmem:[#allocation2 + $0x40] sm:$0xff]
      %v894 = vld [vmem:[#allocation2 + $0x48] sm:$0xff]
      %v895 = vld [vmem:[#allocation2 + $0x50] sm:$0xff]
      %v896 = vld [vmem:[#allocation2 + $0x58] sm:$0xff]
      %v897 = vld [vmem:[#allocation2 + $0x60] sm:$0xff]
      %v898 = vld [vmem:[#allocation2 + $0x68] sm:$0xff]
      %v899 = vld [vmem:[#allocation2 + $0x70] sm:$0xff]
      %v900 = vld [vmem:[#allocation2 + $0x78] sm:$0xff]
      %v901 = vadd.f32 %v885, %v807
      %v902 = vadd.f32 %v886, %v812
      %v903 = vadd.f32 %v887, %v817
      %v904 = vadd.f32 %v888, %v822
      %v905 = vadd.f32 %v889, %v827
      %v906 = vadd.f32 %v890, %v832
      %v907 = vadd.f32 %v891, %v837
      %v908 = vadd.f32 %v892, %v842
      %v909 = vadd.f32 %v893, %v847
      %v910 = vadd.f32 %v894, %v852
      %v911 = vadd.f32 %v895, %v857
      %v912 = vadd.f32 %v896, %v862
      %v913 = vadd.f32 %v897, %v867
      %v914 = vadd.f32 %v898, %v872
      %v915 = vadd.f32 %v899, %v877
      %v916 = vadd.f32 %v900, %v882
      %v917 = vmul.f32 %v901, %v901
      %v918 = vmul.f32 %v902, %v902
      %v919 = vmul.f32 %v903, %v903
      %v920 = vmul.f32 %v904, %v904
      %v921 = vmul.f32 %v905, %v905
      %v922 = vmul.f32 %v906, %v906
      %v923 = vmul.f32 %v907, %v907
      %v924 = vmul.f32 %v908, %v908
      %v925 = vmul.f32 %v909, %v909
      %v926 = vmul.f32 %v910, %v910
      %v927 = vmul.f32 %v911, %v911
      %v928 = vmul.f32 %v912, %v912
      %v929 = vmul.f32 %v913, %v913
      %v930 = vmul.f32 %v914, %v914
      %v931 = vmul.f32 %v915, %v915
      %v932 = vmul.f32 %v916, %v916
      %v933 = vadd.f32 %v917, %v918
      %v934 = vadd.f32 %v933, %v919
      %v935 = vadd.f32 %v934, %v920
      %v936 = vadd.f32 %v935, %v921
      %v937 = vadd.f32 %v936, %v922
      %v938 = vadd.f32 %v937, %v923
      %v939 = vadd.f32 %v938, %v924
      %v940 = vadd.f32 %v939, %v925
      %v941 = vadd.f32 %v940, %v926
      %v942 = vadd.f32 %v941, %v927
      %v943 = vadd.f32 %v942, %v928
      %v944 = vadd.f32 %v943, %v929
      %v945 = vadd.f32 %v944, %v930
      %v946 = vadd.f32 %v945, %v931
      %v947 = vadd.f32 %v946, %v932
      %948 = vadd.xlane.f32.xlu0 %v947
      %v949 = vpop.xlane.xlu0 %948
      %v950 = vrot.slane %v949, 4
      %v951 = vadd.f32 %v949, %v950
      %v952 = vrot.slane %v951, 2
      %v953 = vadd.f32 %v951, %v952
      %v954 = vrot.slane %v953, 1
      %v955 = vadd.f32 %v953, %v954
      %s956 = vtos %v955
      %s957 = smul.f32 %s956, 0.00024414063
      %v958 = vstv %s957
      %959 = vst [vmem:[#allocation10] sm:$0xff] %v958
    $region25: #{tpu_custom_call.1} parent=1 // pred_fallthru
      _
    // Predicated region
    $region26: #{tpu_custom_call.1} parent=1 // pred_check
      _
    $region27: #{tpu_custom_call.1} parent=1 // pred_check_branch
      %961 = sbr.rel (0) target = $region29
    $region28: #{tpu_custom_call.1} parent=1 // pred_region
      %s963 = ssub.s32 128, 128
      %964 = vsyncadd [#allocation7], %s963
      %s966 = sshll.u32 [#allocation10], 4
      %s967 = int_to_ptr.vmem [resolvable:$true] %s966
      %969 = dma.vmem_to_hbm [thread:$0]  %s967, 128, %s2, [#allocation7]
    $region29: #{tpu_custom_call.1} parent=1 // pred_fallthru
      _
    // Predicated region
    $region30: #{tpu_custom_call.1} parent=1 // pred_check
      _
    $region31: #{tpu_custom_call.1} parent=1 // pred_check_branch
      %971 = sbr.rel (0) target = $region33
    $region32: #{tpu_custom_call.1} parent=1 // pred_region
      %972 = dma.done [#allocation7], 128
    $region33: #{tpu_custom_call.1} parent=1 // pred_fallthru
      _
    %973 = vsyncpa [#allocation6], 1
    %974 = vsyncpa [#allocation9], 1
    %975 = vsyncpa [#allocation7], 1

</llo_original>
